<compile_context>
chip_gen: v5e
topology: v5e:2x2
jax: 0.10.0
libtpu: 0.0.40
codegen_flags: <defaults>
</compile_context>

<pallas_src>
import math

import jax
import jax.numpy as jnp
from jax import lax
from jax.experimental import pallas as pl
from jax.experimental.pallas import tpu as pltpu


DROPOUT_P = 0.1
# Single fused constant:  (1 / sqrt(64)) * (1 / (1 - p))  -- scaling + inverted-dropout scale.
COMBINED_SCALE = (1.0 / math.sqrt(64.0)) / (1.0 - DROPOUT_P)
# Keep an element iff its uniform uint32 draw is >= p * 2^32  (keep probability = 1 - p).
KEEP_THRESHOLD = int(round(DROPOUT_P * (2.0 ** 32)))  # 429496730


def _sdpa_dropout_kernel(q_ref, k_ref, v_ref, bits_ref, o_ref):
    # Fold both scalar scales into q once (cheapest place: (S, D) elements).
    q = q_ref[...] * jnp.float32(COMBINED_SCALE)
    k = k_ref[...]
    v = v_ref[...]

    # qk = q @ k^T  (MXU), contraction expressed on k's last dim -> no transposed operand.
    qk = lax.dot_general(
        q, k, dimension_numbers=(((1,), (1,)), ((), ())),
        preferred_element_type=jnp.float32,
    )

    # Training-mode dropout on the scaled logits: integer-threshold keep mask + one select.
    keep = bits_ref[...] >= jnp.uint32(KEEP_THRESHOLD)
    dropped = jnp.where(keep, qk, jnp.float32(0.0))

    # output = dropout_qk @ v  (MXU)
    o_ref[...] = jnp.dot(
        dropped, v, preferred_element_type=jnp.float32
    ).astype(o_ref.dtype)


def sdpa_dropout(q1, k1, v1, rng_key):
    """q1: (S, D), k1: (Sk, D), v1: (Sk, Dv) -> (S, Dv) float32.

    `rng_key` drives the dropout mask; pass a fresh key per step for training fidelity.
    """
    S, _ = q1.shape
    Sk, Dv = v1.shape
    # Uniform uint32 bits for the dropout mask.  Generated outside the kernel so the kernel
    # body uses only portable ops (runs under both TPU compilation and interpret mode).
    bits = jax.random.bits(rng_key, (S, Sk), dtype=jnp.uint32)

    vmem = pl.BlockSpec(memory_space=pltpu.MemorySpace.VMEM)
    return pl.pallas_call(
        _sdpa_dropout_kernel,
        out_shape=jax.ShapeDtypeStruct((S, Dv), jnp.float32),
        in_specs=[vmem, vmem, vmem, vmem],   # q, k, v, dropout bits: full single blocks
        out_specs=vmem,
    )(q1, k1, v1, bits)


if __name__ == "__main__":
    root = jax.random.PRNGKey(0)
    k_q, k_k, k_v, k_drop = jax.random.split(root, 4)

    # Small shapes consistent with the module: seq=8, hidden=8 (the Linear layers are 8->8).
    S, D = 8, 8
    q1 = jax.random.normal(k_q, (S, D), dtype=jnp.float32)
    k1 = jax.random.normal(k_k, (S, D), dtype=jnp.float32)
    v1 = jax.random.normal(k_v, (S, D), dtype=jnp.float32)

    out = sdpa_dropout(q1, k1, v1, k_drop)
    jax.block_until_ready(out)
    assert out.shape == (S, D) and out.dtype == jnp.float32
    print("KERNEL_OK")
</pallas_src>

<mosaic_0001>
module attributes {stable_mosaic.version = 11 : i64} {
  func.func @_sdpa_dropout_kernel(%arg0: memref<8x8xf32, #tpu.memory_space<vmem>>, %arg1: memref<8x8xf32, #tpu.memory_space<vmem>>, %arg2: memref<8x8xf32, #tpu.memory_space<vmem>>, %arg3: memref<8x8xi32, #tpu.memory_space<vmem>>, %arg4: memref<8x8xf32, #tpu.memory_space<vmem>>) attributes {dimension_semantics = [], scalar_prefetch = 0 : i64, scratch_operands = 0 : i64, tpu.core_type = #tpu.core_type<tc>} {
    %c0 = arith.constant 0 : index
    %c0_0 = arith.constant 0 : index
    %0 = vector.load %arg0[%c0, %c0_0] : memref<8x8xf32, #tpu.memory_space<vmem>>, vector<8x8xf32>
    %cst = arith.constant 0.138888896 : f32
    %1 = vector.broadcast %cst : f32 to vector<8x8xf32>
    %2 = arith.mulf %0, %1 : vector<8x8xf32>
    %c0_1 = arith.constant 0 : index
    %c0_2 = arith.constant 0 : index
    %3 = vector.load %arg1[%c0_1, %c0_2] : memref<8x8xf32, #tpu.memory_space<vmem>>, vector<8x8xf32>
    %c0_3 = arith.constant 0 : index
    %c0_4 = arith.constant 0 : index
    %4 = vector.load %arg2[%c0_3, %c0_4] : memref<8x8xf32, #tpu.memory_space<vmem>>, vector<8x8xf32>
    %cst_5 = arith.constant dense<0.000000e+00> : vector<8x8xf32>
    %5 = tpu.matmul %2, %3, %cst_5 {dimension_numbers = #tpu.dot_dimension_numbers<[1], [1], [0], [0], [0, 0, 1, 0], [], []>} : vector<8x8xf32>, vector<8x8xf32>, vector<8x8xf32> -> vector<8x8xf32>
    %c0_6 = arith.constant 0 : index
    %c0_7 = arith.constant 0 : index
    %6 = vector.load %arg3[%c0_6, %c0_7] : memref<8x8xi32, #tpu.memory_space<vmem>>, vector<8x8xi32>
    %c429496730_i32 = arith.constant 429496730 : i32
    %7 = vector.broadcast %c429496730_i32 : i32 to vector<8x8xi32>
    %8 = arith.cmpi uge, %6, %7 : vector<8x8xi32>
    %cst_8 = arith.constant 0.000000e+00 : f32
    %9 = vector.broadcast %cst_8 : f32 to vector<8x8xf32>
    %10 = arith.select %8, %5, %9 : vector<8x8xi1>, vector<8x8xf32>
    %cst_9 = arith.constant dense<0.000000e+00> : vector<8x8xf32>
    %11 = tpu.matmul %10, %4, %cst_9 {dimension_numbers = #tpu.dot_dimension_numbers<[1], [0], [0], [1], [0, 0, 1, 1], [], []>} : vector<8x8xf32>, vector<8x8xf32>, vector<8x8xf32> -> vector<8x8xf32>
    %c0_10 = arith.constant 0 : index
    %c0_11 = arith.constant 0 : index
    %12 = vector.load %arg4[%c0_10, %c0_11] : memref<8x8xf32, #tpu.memory_space<vmem>>, vector<8x8xf32>
    tpu.vector_store %arg4[%c0_10, %c0_11], %11 {strides = array<i32>} : memref<8x8xf32, #tpu.memory_space<vmem>>, vector<8x8xf32>,
    return
  }
}

</mosaic_0001>

<llo_original>
// kernel: tpu_custom_call.1
$region0: #{tpu_custom_call.1}
  #allocation0 [shape = 'u32[]', space=smem, size = 0x4, offset = 0x4, fixed_abs, tag = 'smem constant byte address 0x4 - core index']
  #allocation1 [shape = 'u32[72,128]{1,0:T(1,128)}', space=vmem, size = 0x9000, scoped, tag = 'internal scratch']
  %s0 = inlined_call_operand.hbm [shape: f32[8,8], index: 0, kind: input, shape index: {}]
  %s1 = inlined_call_operand.hbm [shape: f32[8,8], index: 1, kind: input, shape index: {}]
  %s2 = inlined_call_operand.hbm [shape: f32[8,8], index: 2, kind: input, shape index: {}]
  %s3 = inlined_call_operand.hbm [shape: u32[8,8], index: 3, kind: input, shape index: {}]
  %s4 = inlined_call_operand.hbm [shape: f32[8,8], index: 4, kind: output, shape index: {}]
  %s5 = sld [smem:[#allocation0]]
  $region42: #{tpu_custom_call.1} parent=0
    _
  %s7 = ssub.s32 1, %s5
  %s8 = scalar_select 0, %s7, %s5
  $region1: #{tpu_custom_call.1} parent=0
    #allocation2 [shape = 'u8[4096]{0}', space=vmem, size = 0x1000, scoped, tag = 'input window, operand 0, single buffered']
    #allocation3 [shape = 's32[1]{0}', space=sflag, size = 0x4, scoped, tag = 'scoped memory for tpu_custom_call.1']
    #allocation4 [shape = 's32[1]{0}', space=sflag, size = 0x4, scoped, tag = 'scoped memory for tpu_custom_call.1']
    #allocation5 [shape = 'u8[4096]{0}', space=vmem, size = 0x1000, scoped, tag = 'input window, operand 1, single buffered']
    #allocation6 [shape = 's32[1]{0}', space=sflag, size = 0x4, scoped, tag = 'scoped memory for tpu_custom_call.1']
    #allocation7 [shape = 'u8[4096]{0}', space=vmem, size = 0x1000, scoped, tag = 'input window, operand 2, single buffered']
    #allocation8 [shape = 'u8[4096]{0}', space=vmem, size = 0x1000, scoped, tag = 'input window, operand 3, single buffered']
    #allocation9 [shape = 's32[1]{0}', space=sflag, size = 0x4, scoped, tag = 'scoped memory for tpu_custom_call.1']
    #allocation10 [shape = 'u8[4096]{0}', space=vmem, size = 0x1000, scoped, tag = 'output window, operand 0, single buffered']
    %9 = vsyncpa [#allocation3], 0
    %10 = vsyncpa [#allocation6], 0
    %11 = vsyncpa [#allocation9], 0
    %12 = vsyncpa [#allocation4], 0
    // Predicated region
    $region2: #{tpu_custom_call.1} parent=1 // pred_check
      _
    $region3: #{tpu_custom_call.1} parent=1 // pred_check_branch
      %14 = sbr.rel (0) target = $region5
    $region4: #{tpu_custom_call.1} parent=1 // pred_region
      %16 = vsyncadd [#allocation3], 0
      %s18 = sshll.u32 %s0, 4
      %s19 = int_to_ptr.hbm [resolvable:$true] %s18
      %s20 = sshll.u32 [#allocation2], 4
      %s21 = int_to_ptr.vmem [resolvable:$true] %s20
      %23 = dma.hbm_to_vmem [thread:$0]  %s19, 128, %s21, [#allocation3]
    $region5: #{tpu_custom_call.1} parent=1 // pred_fallthru
      _
    // Predicated region
    $region6: #{tpu_custom_call.1} parent=1 // pred_check
      _
    $region7: #{tpu_custom_call.1} parent=1 // pred_check_branch
      %25 = sbr.rel (0) target = $region9
    $region8: #{tpu_custom_call.1} parent=1 // pred_region
      %27 = vsyncadd [#allocation6], 0
      %s29 = sshll.u32 %s1, 4
      %s30 = int_to_ptr.hbm [resolvable:$true] %s29
      %s31 = sshll.u32 [#allocation5], 4
      %s32 = int_to_ptr.vmem [resolvable:$true] %s31
      %34 = dma.hbm_to_vmem [thread:$0]  %s30, 128, %s32, [#allocation6]
    $region9: #{tpu_custom_call.1} parent=1 // pred_fallthru
      _
    // Predicated region
    $region10: #{tpu_custom_call.1} parent=1 // pred_check
      _
    $region11: #{tpu_custom_call.1} parent=1 // pred_check_branch
      %36 = sbr.rel (0) target = $region13
    $region12: #{tpu_custom_call.1} parent=1 // pred_region
      %38 = vsyncadd [#allocation6], 0
      %s40 = sshll.u32 %s2, 4
      %s41 = int_to_ptr.hbm [resolvable:$true] %s40
      %s42 = sshll.u32 [#allocation7], 4
      %s43 = int_to_ptr.vmem [resolvable:$true] %s42
      %45 = dma.hbm_to_vmem [thread:$0]  %s41, 128, %s43, [#allocation6]
    $region13: #{tpu_custom_call.1} parent=1 // pred_fallthru
      _
    // Predicated region
    $region14: #{tpu_custom_call.1} parent=1 // pred_check
      _
    $region15: #{tpu_custom_call.1} parent=1 // pred_check_branch
      %47 = sbr.rel (0) target = $region17
    $region16: #{tpu_custom_call.1} parent=1 // pred_region
      %49 = vsyncadd [#allocation9], 0
      %s51 = sshll.u32 %s3, 4
      %s52 = int_to_ptr.hbm [resolvable:$true] %s51
      %s53 = sshll.u32 [#allocation8], 4
      %s54 = int_to_ptr.vmem [resolvable:$true] %s53
      %56 = dma.hbm_to_vmem [thread:$0]  %s52, 128, %s54, [#allocation9]
    $region17: #{tpu_custom_call.1} parent=1 // pred_fallthru
      _
    // Predicated region
    $region18: #{tpu_custom_call.1} parent=1 // pred_check
      _
    $region19: #{tpu_custom_call.1} parent=1 // pred_check_branch
      %58 = sbr.rel (0) target = $region21
    $region20: #{tpu_custom_call.1} parent=1 // pred_region
      %60 = dma.done [#allocation3], 128
    $region21: #{tpu_custom_call.1} parent=1 // pred_fallthru
      _
    // Predicated region
    $region22: #{tpu_custom_call.1} parent=1 // pred_check
      _
    $region23: #{tpu_custom_call.1} parent=1 // pred_check_branch
      %62 = sbr.rel (0) target = $region25
    $region24: #{tpu_custom_call.1} parent=1 // pred_region
      %64 = dma.done [#allocation6], 128
    $region25: #{tpu_custom_call.1} parent=1 // pred_fallthru
      _
    // Predicated region
    $region26: #{tpu_custom_call.1} parent=1 // pred_check
      _
    $region27: #{tpu_custom_call.1} parent=1 // pred_check_branch
      %66 = sbr.rel (0) target = $region29
    $region28: #{tpu_custom_call.1} parent=1 // pred_region
      %68 = dma.done [#allocation6], 128
    $region29: #{tpu_custom_call.1} parent=1 // pred_fallthru
      _
    // Predicated region
    $region30: #{tpu_custom_call.1} parent=1 // pred_check
      _
    $region31: #{tpu_custom_call.1} parent=1 // pred_check_branch
      %70 = sbr.rel (0) target = $region33
    $region32: #{tpu_custom_call.1} parent=1 // pred_region
      %72 = dma.done [#allocation9], 128
    $region33: #{tpu_custom_call.1} parent=1 // pred_fallthru
      _
    %v73 = vld [vmem:[#allocation2] sm:$0xff]
    %v74 = vmul.f32 %v73, 0.1388889
    %v75 = vld [vmem:[#allocation5] sm:$0xff]
    %v76 = vld [vmem:[#allocation7] sm:$0xff]
    %vm77 = vcmask 64512
    %v79 = vsel %vm77, %v74, 0
    %v82 = vsel %vm77, %v75, 0
    %84 = vmatpush.xpose.msra.mxu0 0.0
    %85 = vmatpush.xpose.msra.mxu0 0.0
    %86 = vmatpush.xpose.msra.mxu0 0.0
    %87 = vmatpush.xpose.msra.mxu0 0.0
    %88 = vmatpush.xpose.msra.mxu0 0.0
    %89 = vmatpush.xpose.msra.mxu0 0.0
    %90 = vmatpush.xpose.msra.mxu0 0.0
    %91 = vmatpush.xpose.msra.mxu0 0.0
    %92 = vmatpush.xpose.msra.mxu0 0.0
    %93 = vmatpush.xpose.msra.mxu0 0.0
    %94 = vmatpush.xpose.msra.mxu0 0.0
    %95 = vmatpush.xpose.msra.mxu0 0.0
    %96 = vmatpush.xpose.msra.mxu0 0.0
    %97 = vmatpush.xpose.msra.mxu0 0.0
    %98 = vmatpush.xpose.msra.mxu0 0.0
    %99 = vmatpush.xpose.msra.mxu0 %v82
    %100 = vmatmul.f32.gmra.mxu0 %v79
    %v101 = vpop.f32.mrf.mxu0
    %v102 = vadd.f32 0.0, %v101
    %103 = vdwg.mxu0
    %v104 = vld [vmem:[#allocation8] sm:$0xff]
    %v105 = vadd.s32 %v104, 2147483648
    %vm107 = vcmp.ge.s32.totalorder %v105, 2576980378
    %v108 = vsel %vm107, %v102, 0.0
    %v110 = vsel %vm77, %v108, 0
    %112 = vmatpush.msra.mxu0 0.0
    %113 = vmatpush.msra.mxu0 0.0
    %114 = vmatpush.msra.mxu0 0.0
    %115 = vmatpush.msra.mxu0 0.0
    %116 = vmatpush.msra.mxu0 0.0
    %117 = vmatpush.msra.mxu0 0.0
    %118 = vmatpush.msra.mxu0 0.0
    %119 = vmatpush.msra.mxu0 0.0
    %120 = vmatpush.msra.mxu0 0.0
    %121 = vmatpush.msra.mxu0 0.0
    %122 = vmatpush.msra.mxu0 0.0
    %123 = vmatpush.msra.mxu0 0.0
    %124 = vmatpush.msra.mxu0 0.0
    %125 = vmatpush.msra.mxu0 0.0
    %126 = vmatpush.msra.mxu0 0.0
    %127 = vmatpush.msra.mxu0 %v76
    %128 = vmatmul.f32.gmra.mxu0 %v110
    %v129 = vpop.f32.mrf.mxu0
    %v130 = vadd.f32 0.0, %v129
    %131 = vdwg.mxu0
    %132 = vst.msk [vmem:[#allocation10] sm:$0xff] %vm77, %v130
    // Predicated region
    $region34: #{tpu_custom_call.1} parent=1 // pred_check
      _
    $region35: #{tpu_custom_call.1} parent=1 // pred_check_branch
      %134 = sbr.rel (0) target = $region37
    $region36: #{tpu_custom_call.1} parent=1 // pred_region
      %136 = vsyncadd [#allocation4], 0
      %s138 = sshll.u32 [#allocation10], 4
      %s139 = int_to_ptr.vmem [resolvable:$true] %s138
      %s140 = sshll.u32 %s4, 4
      %s141 = int_to_ptr.hbm [resolvable:$true] %s140
      %143 = dma.vmem_to_hbm [thread:$0]  %s139, 128, %s141, [#allocation4]
    $region37: #{tpu_custom_call.1} parent=1 // pred_fallthru
      _
    // Predicated region
    $region38: #{tpu_custom_call.1} parent=1 // pred_check
      _
    $region39: #{tpu_custom_call.1} parent=1 // pred_check_branch
      %145 = sbr.rel (0) target = $region41
    $region40: #{tpu_custom_call.1} parent=1 // pred_region
      %147 = dma.done [#allocation4], 128
    $region41: #{tpu_custom_call.1} parent=1 // pred_fallthru
      _
    %148 = vsyncpa [#allocation3], 1
    %149 = vsyncpa [#allocation6], 1
    %150 = vsyncpa [#allocation9], 1
    %151 = vsyncpa [#allocation4], 1

</llo_original>
